<compile_context>
chip_gen: v6e
topology: v6e:2x2x1
jax: 0.10.0
libtpu: 0.0.40
codegen_flags: <defaults>
</compile_context>

<pallas_src>
import jax
import jax.numpy as jnp
from jax.experimental import pallas as pl
from jax.experimental.pallas import tpu as pltpu


def _round_up(n, m):
    return ((n + m - 1) // m) * m


def bulk_regressor_kernel(
    x_ref,      # (TB, S*F)   batch tile of the (pre-flattened) input
    w1c_ref,    # (T, S*F, H) composed first-stage weights, all targets
    b1c_ref,    # (T, 1, H)   composed first-stage bias, all targets
    w2_ref,     # (T, H, P)   output weights, all targets
    b2_ref,     # (T, 1, P)
    o_ref,      # (TB, T*P)   lane-dense output slab
):
    T = w2_ref.shape[0]
    mxu_dtype = w1c_ref.dtype
    xm = x_ref[...].astype(mxu_dtype)                        # (TB, S*F)

    outs = []
    for t in range(T):                                       # static, fully unrolled
        h = jnp.dot(xm, w1c_ref[t], preferred_element_type=jnp.float32)
        h = h + b1c_ref[t].astype(jnp.float32)               # (TB, H)
        h = jnp.where(h >= 0, h, 0.01 * h)                   # LeakyReLU default slope
        o = jnp.dot(h.astype(mxu_dtype), w2_ref[t],
                    preferred_element_type=jnp.float32)
        o = o + b2_ref[t].astype(jnp.float32)                # (TB, P)
        outs.append(o)

    # TODO(synk): training-mode dropout (random mask) intentionally omitted.
    o_ref[...] = jnp.concatenate(outs, axis=-1).astype(o_ref.dtype)


def bulk_regressor(x, params, *, tile_b=512, sort_output=False):
    """x: (B, seq_len, n_feats) -> (B, pred_len, n_targets)."""
    B, S, F = x.shape
    T, S_w, H = params["w1"].shape
    P = params["w2"].shape[-1]
    assert S_w == S and params["wlin"].shape == (T, F)

    w_dtype = jnp.dtype(params["w1"].dtype)
    SF = S * F

    # Pre-compose the first Linear into the per-target hidden matmul (F tiny):
    #   h[b,t,:] = sum_{s,f} x[b,s,f]*wlin[t,f]*w1[t,s,:] + b1[t,:] + blin[t]*sum_s w1[t,s,:]
    w1c = (params["w1"][:, :, None, :] * params["wlin"][:, None, :, None]
           ).reshape(T, SF, H).astype(w_dtype)
    b1c = (params["b1"].astype(jnp.float32)
           + params["blin"].astype(jnp.float32)[:, None]
           * jnp.sum(params["w1"].astype(jnp.float32), axis=1)
           ).reshape(T, 1, H)
    w2 = params["w2"].astype(w_dtype)
    b2 = params["b2"].astype(jnp.float32).reshape(T, 1, P)

    x2d = x.reshape(B, SF)

    in_isz = jnp.dtype(x.dtype).itemsize
    w_isz = w_dtype.itemsize

    def vmem_needed(tb):
        pad8 = lambda n: _round_up(n, 8)
        pad128 = lambda n: _round_up(n, 128)
        x_b = tb * pad128(SF) * in_isz * 2                       # double-buffered
        o_b = tb * pad128(T * P) * in_isz * 2
        w_b = (T * pad8(SF) * pad128(H) * w_isz
               + T * 8 * pad128(H) * 4
               + T * pad8(H) * pad128(P) * w_isz
               + T * 8 * pad128(P) * 4) * 2
        return x_b + o_b + w_b

    # Generation-aware VMEM budget: ~75% of physical capacity (48 MiB on v7x,
    # 96 MiB on v5e/v6e), leaving headroom for compiler scratch / semaphores.
    try:
        vmem_cap = int(pltpu.get_tpu_info().vmem_capacity_bytes)
    except Exception:
        vmem_cap = 64 * 1024 * 1024
    budget = int(0.75 * vmem_cap)

    # Adaptive row tile (multiple of 8); shrink until the estimate fits.
    tile_b = _round_up(max(min(tile_b, _round_up(B, 8)), 8), 8)
    while tile_b > 8 and vmem_needed(tile_b) > budget:
        tile_b = _round_up(max(tile_b // 2, 8), 8)

    b_pad = _round_up(B, tile_b)
    if b_pad != B:
        x2d = jnp.pad(x2d, ((0, b_pad - B), (0, 0)))

    vmem_limit = int(min(budget, max(vmem_needed(tile_b) + (4 << 20), 16 << 20)))

    grid = (b_pad // tile_b,)
    out2d = pl.pallas_call(
        bulk_regressor_kernel,
        out_shape=jax.ShapeDtypeStruct((b_pad, T * P), x.dtype),
        grid_spec=pltpu.PrefetchScalarGridSpec(
            num_scalar_prefetch=0,
            grid=grid,
            in_specs=[
                pl.BlockSpec((tile_b, SF), lambda i: (i, 0)),     # batch tile
                pl.BlockSpec((T, SF, H), lambda i: (0, 0, 0)),    # resident weights
                pl.BlockSpec((T, 1, H), lambda i: (0, 0, 0)),
                pl.BlockSpec((T, H, P), lambda i: (0, 0, 0)),
                pl.BlockSpec((T, 1, P), lambda i: (0, 0, 0)),
            ],
            out_specs=pl.BlockSpec((tile_b, T * P), lambda i: (i, 0)),
        ),
        compiler_params=pltpu.CompilerParams(
            dimension_semantics=("parallel",),
            vmem_limit_bytes=vmem_limit,
        ),
    )(x2d, w1c, b1c, w2, b2)

    out = out2d[:B].reshape(B, T, P)            # drop padded rows, split targets
    out = jnp.transpose(out, (0, 2, 1))         # (B, pred_len, n_targets) == stack(dim=-1)
    # Dropout is the identity at inference.
    if sort_output:
        # TODO(synk): torch.sort has no clean Pallas equivalent; done in plain JAX.
        out = jnp.sort(out, axis=-1)
    return out


def init_params(key, seq_len, n_feats, n_targets, pred_len, n_hidden=None,
                dtype=jnp.float32):
    """Deterministic xavier-style init in the module's natural layout."""
    n_hidden = pred_len * 4 if n_hidden is None else n_hidden   # module default
    ks = jax.random.split(key, 6)

    def xavier(k, shape, fan_in, fan_out):
        scale = (2.0 / (fan_in + fan_out)) ** 0.5
        return (scale * jax.random.normal(k, shape, jnp.float32)).astype(dtype)

    wlin = xavier(ks[0], (n_targets, n_feats), n_feats, n_targets)
    blin = (0.01 * jax.random.normal(ks[1], (n_targets,), jnp.float32)).astype(dtype)
    w1 = xavier(ks[2], (n_targets, seq_len, n_hidden), seq_len, n_hidden)
    b1 = (0.01 * jax.random.normal(ks[3], (n_targets, n_hidden), jnp.float32)).astype(dtype)
    w2 = xavier(ks[4], (n_targets, n_hidden, pred_len), n_hidden, pred_len)
    b2 = (0.01 * jax.random.normal(ks[5], (n_targets, pred_len), jnp.float32)).astype(dtype)
    return dict(wlin=wlin, blin=blin, w1=w1, b1=b1, w2=w2, b2=b2)


def reference(x, p):
    """Pure-JAX reference matching the PyTorch BulkRegressor forward (inference)."""
    y = jnp.einsum("bsf,tf->bts", x, p["wlin"]) + p["blin"][None, :, None]   # (B, T, S)
    h = jnp.einsum("bts,tsh->bth", y, p["w1"]) + p["b1"][None]               # (B, T, H)
    h = jnp.where(h >= 0, h, 0.01 * h)                                       # LeakyReLU(0.01)
    o = jnp.einsum("bth,thp->btp", h, p["w2"]) + p["b2"][None]               # (B, T, P)
    return jnp.transpose(o, (0, 2, 1))                                       # (B, P, T)


if __name__ == "__main__":
    # Small shapes consistent with the module:
    #   batch=2, seq_len(in_dim)=16, n_feats=4, n_targets=4, pred_len=8,
    #   n_hidden = pred_len * 4 = 32 (module default).
    B, seq_len, n_feats, n_targets, pred_len = 2, 16, 4, 4, 8

    key = jax.random.PRNGKey(0)
    kx, kp = jax.random.split(key)
    x = jax.random.normal(kx, (B, seq_len, n_feats), jnp.float32)
    params = init_params(kp, seq_len, n_feats, n_targets, pred_len)

    out = bulk_regressor(x, params)
    out = jax.block_until_ready(out)

    ref = reference(x, params)
    assert out.shape == (B, pred_len, n_targets), out.shape
    assert jnp.allclose(out, ref, atol=1e-4, rtol=1e-4), float(jnp.max(jnp.abs(out - ref)))
    print("KERNEL_OK")
</pallas_src>

<mosaic_0001>
module attributes {stable_mosaic.version = 11 : i64} {
  func.func @bulk_regressor_kernel(%arg0: i32, %arg1: memref<8x64xf32, #tpu.memory_space<vmem>>, %arg2: memref<4x64x32xf32, #tpu.memory_space<vmem>>, %arg3: memref<4x1x32xf32, #tpu.memory_space<vmem>>, %arg4: memref<4x32x8xf32, #tpu.memory_space<vmem>>, %arg5: memref<4x1x8xf32, #tpu.memory_space<vmem>>, %arg6: memref<8x32xf32, #tpu.memory_space<vmem>>) attributes {dimension_semantics = [#tpu.dimension_semantics<parallel>], iteration_bounds = array<i64: 1>, scalar_prefetch = 0 : i64, scratch_operands = 0 : i64, tpu.core_type = #tpu.core_type<tc>, window_params = [{transform_indices = @transform_0, window_bounds = array<i64: 8, 64>}, {pipeline_mode = #tpu.pipeline_mode<synchronous>, transform_indices = @transform_1, window_bounds = array<i64: 4, 64, 32>}, {pipeline_mode = #tpu.pipeline_mode<synchronous>, transform_indices = @transform_2, window_bounds = array<i64: 4, 1, 32>}, {pipeline_mode = #tpu.pipeline_mode<synchronous>, transform_indices = @transform_3, window_bounds = array<i64: 4, 32, 8>}, {pipeline_mode = #tpu.pipeline_mode<synchronous>, transform_indices = @transform_4, window_bounds = array<i64: 4, 1, 8>}, {transform_indices = @transform_5, window_bounds = array<i64: 8, 32>}]} {
    %c0 = arith.constant 0 : index
    %c0_0 = arith.constant 0 : index
    %0 = vector.load %arg1[%c0, %c0_0] : memref<8x64xf32, #tpu.memory_space<vmem>>, vector<8x64xf32>
    %c0_1 = arith.constant 0 : index
    %c0_2 = arith.constant 0 : index
    %c0_3 = arith.constant 0 : index
    %1 = vector.load %arg2[%c0_1, %c0_2, %c0_3] : memref<4x64x32xf32, #tpu.memory_space<vmem>>, vector<1x64x32xf32>
    %2 = vector.shape_cast %1 : vector<1x64x32xf32> to vector<64x32xf32>
    %cst = arith.constant dense<0.000000e+00> : vector<8x32xf32>
    %3 = tpu.matmul %0, %2, %cst {dimension_numbers = #tpu.dot_dimension_numbers<[1], [0], [0], [1], [0, 0, 1, 1], [], []>} : vector<8x64xf32>, vector<64x32xf32>, vector<8x32xf32> -> vector<8x32xf32>
    %c0_4 = arith.constant 0 : index
    %c0_5 = arith.constant 0 : index
    %c0_6 = arith.constant 0 : index
    %4 = vector.load %arg3[%c0_4, %c0_5, %c0_6] : memref<4x1x32xf32, #tpu.memory_space<vmem>>, vector<1x1x32xf32>
    %5 = vector.shape_cast %4 : vector<1x1x32xf32> to vector<1x32xf32>
    %6 = vector.broadcast %5 : vector<1x32xf32> to vector<8x32xf32>
    %7 = arith.addf %3, %6 : vector<8x32xf32>
    %cst_7 = arith.constant 0.000000e+00 : f32
    %8 = vector.broadcast %cst_7 : f32 to vector<8x32xf32>
    %9 = arith.cmpf oge, %7, %8 : vector<8x32xf32>
    %cst_8 = arith.constant 0.00999999977 : f32
    %10 = vector.broadcast %cst_8 : f32 to vector<8x32xf32>
    %11 = arith.mulf %10, %7 : vector<8x32xf32>
    %12 = arith.select %9, %7, %11 : vector<8x32xi1>, vector<8x32xf32>
    %c0_9 = arith.constant 0 : index
    %c0_10 = arith.constant 0 : index
    %c0_11 = arith.constant 0 : index
    %13 = vector.load %arg4[%c0_9, %c0_10, %c0_11] : memref<4x32x8xf32, #tpu.memory_space<vmem>>, vector<1x32x8xf32>
    %14 = vector.shape_cast %13 : vector<1x32x8xf32> to vector<32x8xf32>
    %cst_12 = arith.constant dense<0.000000e+00> : vector<8x8xf32>
    %15 = tpu.matmul %12, %14, %cst_12 {dimension_numbers = #tpu.dot_dimension_numbers<[1], [0], [0], [1], [0, 0, 1, 1], [], []>} : vector<8x32xf32>, vector<32x8xf32>, vector<8x8xf32> -> vector<8x8xf32>
    %c0_13 = arith.constant 0 : index
    %c0_14 = arith.constant 0 : index
    %c0_15 = arith.constant 0 : index
    %16 = vector.load %arg5[%c0_13, %c0_14, %c0_15] : memref<4x1x8xf32, #tpu.memory_space<vmem>>, vector<1x1x8xf32>
    %17 = vector.shape_cast %16 : vector<1x1x8xf32> to vector<1x8xf32>
    %18 = vector.broadcast %17 : vector<1x8xf32> to vector<8x8xf32>
    %19 = arith.addf %15, %18 : vector<8x8xf32>
    %c1 = arith.constant 1 : index
    %c0_16 = arith.constant 0 : index
    %c0_17 = arith.constant 0 : index
    %20 = vector.load %arg2[%c1, %c0_16, %c0_17] : memref<4x64x32xf32, #tpu.memory_space<vmem>>, vector<1x64x32xf32>
    %21 = vector.shape_cast %20 : vector<1x64x32xf32> to vector<64x32xf32>
    %cst_18 = arith.constant dense<0.000000e+00> : vector<8x32xf32>
    %22 = tpu.matmul %0, %21, %cst_18 {dimension_numbers = #tpu.dot_dimension_numbers<[1], [0], [0], [1], [0, 0, 1, 1], [], []>} : vector<8x64xf32>, vector<64x32xf32>, vector<8x32xf32> -> vector<8x32xf32>
    %c1_19 = arith.constant 1 : index
    %c0_20 = arith.constant 0 : index
    %c0_21 = arith.constant 0 : index
    %23 = vector.load %arg3[%c1_19, %c0_20, %c0_21] : memref<4x1x32xf32, #tpu.memory_space<vmem>>, vector<1x1x32xf32>
    %24 = vector.shape_cast %23 : vector<1x1x32xf32> to vector<1x32xf32>
    %25 = vector.broadcast %24 : vector<1x32xf32> to vector<8x32xf32>
    %26 = arith.addf %22, %25 : vector<8x32xf32>
    %cst_22 = arith.constant 0.000000e+00 : f32
    %27 = vector.broadcast %cst_22 : f32 to vector<8x32xf32>
    %28 = arith.cmpf oge, %26, %27 : vector<8x32xf32>
    %cst_23 = arith.constant 0.00999999977 : f32
    %29 = vector.broadcast %cst_23 : f32 to vector<8x32xf32>
    %30 = arith.mulf %29, %26 : vector<8x32xf32>
    %31 = arith.select %28, %26, %30 : vector<8x32xi1>, vector<8x32xf32>
    %c1_24 = arith.constant 1 : index
    %c0_25 = arith.constant 0 : index
    %c0_26 = arith.constant 0 : index
    %32 = vector.load %arg4[%c1_24, %c0_25, %c0_26] : memref<4x32x8xf32, #tpu.memory_space<vmem>>, vector<1x32x8xf32>
    %33 = vector.shape_cast %32 : vector<1x32x8xf32> to vector<32x8xf32>
    %cst_27 = arith.constant dense<0.000000e+00> : vector<8x8xf32>
    %34 = tpu.matmul %31, %33, %cst_27 {dimension_numbers = #tpu.dot_dimension_numbers<[1], [0], [0], [1], [0, 0, 1, 1], [], []>} : vector<8x32xf32>, vector<32x8xf32>, vector<8x8xf32> -> vector<8x8xf32>
    %c1_28 = arith.constant 1 : index
    %c0_29 = arith.constant 0 : index
    %c0_30 = arith.constant 0 : index
    %35 = vector.load %arg5[%c1_28, %c0_29, %c0_30] : memref<4x1x8xf32, #tpu.memory_space<vmem>>, vector<1x1x8xf32>
    %36 = vector.shape_cast %35 : vector<1x1x8xf32> to vector<1x8xf32>
    %37 = vector.broadcast %36 : vector<1x8xf32> to vector<8x8xf32>
    %38 = arith.addf %34, %37 : vector<8x8xf32>
    %c2 = arith.constant 2 : index
    %c0_31 = arith.constant 0 : index
    %c0_32 = arith.constant 0 : index
    %39 = vector.load %arg2[%c2, %c0_31, %c0_32] : memref<4x64x32xf32, #tpu.memory_space<vmem>>, vector<1x64x32xf32>
    %40 = vector.shape_cast %39 : vector<1x64x32xf32> to vector<64x32xf32>
    %cst_33 = arith.constant dense<0.000000e+00> : vector<8x32xf32>
    %41 = tpu.matmul %0, %40, %cst_33 {dimension_numbers = #tpu.dot_dimension_numbers<[1], [0], [0], [1], [0, 0, 1, 1], [], []>} : vector<8x64xf32>, vector<64x32xf32>, vector<8x32xf32> -> vector<8x32xf32>
    %c2_34 = arith.constant 2 : index
    %c0_35 = arith.constant 0 : index
    %c0_36 = arith.constant 0 : index
    %42 = vector.load %arg3[%c2_34, %c0_35, %c0_36] : memref<4x1x32xf32, #tpu.memory_space<vmem>>, vector<1x1x32xf32>
    %43 = vector.shape_cast %42 : vector<1x1x32xf32> to vector<1x32xf32>
    %44 = vector.broadcast %43 : vector<1x32xf32> to vector<8x32xf32>
    %45 = arith.addf %41, %44 : vector<8x32xf32>
    %cst_37 = arith.constant 0.000000e+00 : f32
    %46 = vector.broadcast %cst_37 : f32 to vector<8x32xf32>
    %47 = arith.cmpf oge, %45, %46 : vector<8x32xf32>
    %cst_38 = arith.constant 0.00999999977 : f32
    %48 = vector.broadcast %cst_38 : f32 to vector<8x32xf32>
    %49 = arith.mulf %48, %45 : vector<8x32xf32>
    %50 = arith.select %47, %45, %49 : vector<8x32xi1>, vector<8x32xf32>
    %c2_39 = arith.constant 2 : index
    %c0_40 = arith.constant 0 : index
    %c0_41 = arith.constant 0 : index
    %51 = vector.load %arg4[%c2_39, %c0_40, %c0_41] : memref<4x32x8xf32, #tpu.memory_space<vmem>>, vector<1x32x8xf32>
    %52 = vector.shape_cast %51 : vector<1x32x8xf32> to vector<32x8xf32>
    %cst_42 = arith.constant dense<0.000000e+00> : vector<8x8xf32>
    %53 = tpu.matmul %50, %52, %cst_42 {dimension_numbers = #tpu.dot_dimension_numbers<[1], [0], [0], [1], [0, 0, 1, 1], [], []>} : vector<8x32xf32>, vector<32x8xf32>, vector<8x8xf32> -> vector<8x8xf32>
    %c2_43 = arith.constant 2 : index
    %c0_44 = arith.constant 0 : index
    %c0_45 = arith.constant 0 : index
    %54 = vector.load %arg5[%c2_43, %c0_44, %c0_45] : memref<4x1x8xf32, #tpu.memory_space<vmem>>, vector<1x1x8xf32>
    %55 = vector.shape_cast %54 : vector<1x1x8xf32> to vector<1x8xf32>
    %56 = vector.broadcast %55 : vector<1x8xf32> to vector<8x8xf32>
    %57 = arith.addf %53, %56 : vector<8x8xf32>
    %c3 = arith.constant 3 : index
    %c0_46 = arith.constant 0 : index
    %c0_47 = arith.constant 0 : index
    %58 = vector.load %arg2[%c3, %c0_46, %c0_47] : memref<4x64x32xf32, #tpu.memory_space<vmem>>, vector<1x64x32xf32>
    %59 = vector.shape_cast %58 : vector<1x64x32xf32> to vector<64x32xf32>
    %cst_48 = arith.constant dense<0.000000e+00> : vector<8x32xf32>
    %60 = tpu.matmul %0, %59, %cst_48 {dimension_numbers = #tpu.dot_dimension_numbers<[1], [0], [0], [1], [0, 0, 1, 1], [], []>} : vector<8x64xf32>, vector<64x32xf32>, vector<8x32xf32> -> vector<8x32xf32>
    %c3_49 = arith.constant 3 : index
    %c0_50 = arith.constant 0 : index
    %c0_51 = arith.constant 0 : index
    %61 = vector.load %arg3[%c3_49, %c0_50, %c0_51] : memref<4x1x32xf32, #tpu.memory_space<vmem>>, vector<1x1x32xf32>
    %62 = vector.shape_cast %61 : vector<1x1x32xf32> to vector<1x32xf32>
    %63 = vector.broadcast %62 : vector<1x32xf32> to vector<8x32xf32>
    %64 = arith.addf %60, %63 : vector<8x32xf32>
    %cst_52 = arith.constant 0.000000e+00 : f32
    %65 = vector.broadcast %cst_52 : f32 to vector<8x32xf32>
    %66 = arith.cmpf oge, %64, %65 : vector<8x32xf32>
    %cst_53 = arith.constant 0.00999999977 : f32
    %67 = vector.broadcast %cst_53 : f32 to vector<8x32xf32>
    %68 = arith.mulf %67, %64 : vector<8x32xf32>
    %69 = arith.select %66, %64, %68 : vector<8x32xi1>, vector<8x32xf32>
    %c3_54 = arith.constant 3 : index
    %c0_55 = arith.constant 0 : index
    %c0_56 = arith.constant 0 : index
    %70 = vector.load %arg4[%c3_54, %c0_55, %c0_56] : memref<4x32x8xf32, #tpu.memory_space<vmem>>, vector<1x32x8xf32>
    %71 = vector.shape_cast %70 : vector<1x32x8xf32> to vector<32x8xf32>
    %cst_57 = arith.constant dense<0.000000e+00> : vector<8x8xf32>
    %72 = tpu.matmul %69, %71, %cst_57 {dimension_numbers = #tpu.dot_dimension_numbers<[1], [0], [0], [1], [0, 0, 1, 1], [], []>} : vector<8x32xf32>, vector<32x8xf32>, vector<8x8xf32> -> vector<8x8xf32>
    %c3_58 = arith.constant 3 : index
    %c0_59 = arith.constant 0 : index
    %c0_60 = arith.constant 0 : index
    %73 = vector.load %arg5[%c3_58, %c0_59, %c0_60] : memref<4x1x8xf32, #tpu.memory_space<vmem>>, vector<1x1x8xf32>
    %74 = vector.shape_cast %73 : vector<1x1x8xf32> to vector<1x8xf32>
    %75 = vector.broadcast %74 : vector<1x8xf32> to vector<8x8xf32>
    %76 = arith.addf %72, %75 : vector<8x8xf32>
    %77 = tpu.concatenate %19, %38, %57, %76 in 1 : vector<8x8xf32>, vector<8x8xf32>, vector<8x8xf32>, vector<8x8xf32> -> vector<8x32xf32>
    %c0_61 = arith.constant 0 : index
    %c0_62 = arith.constant 0 : index
    %78 = vector.load %arg6[%c0_61, %c0_62] : memref<8x32xf32, #tpu.memory_space<vmem>>, vector<8x32xf32>
    tpu.vector_store %arg6[%c0_61, %c0_62], %77 {strides = array<i32>} : memref<8x32xf32, #tpu.memory_space<vmem>>, vector<8x32xf32>,
    return
  }
  func.func @transform_0(%arg0: i32) -> (i32, i32) {
    %c0_i32 = arith.constant 0 : i32
    %c0_i32_0 = arith.constant 0 : i32
    return %arg0, %c0_i32 : i32, i32
  }
  func.func @transform_1(%arg0: i32) -> (i32, i32, i32) {
    %c0_i32 = arith.constant 0 : i32
    %c0_i32_0 = arith.constant 0 : i32
    %c0_i32_1 = arith.constant 0 : i32
    %c0_i32_2 = arith.constant 0 : i32
    return %c0_i32, %c0_i32_0, %c0_i32_1 : i32, i32, i32
  }
  func.func @transform_2(%arg0: i32) -> (i32, i32, i32) {
    %c0_i32 = arith.constant 0 : i32
    %c0_i32_0 = arith.constant 0 : i32
    %c0_i32_1 = arith.constant 0 : i32
    %c0_i32_2 = arith.constant 0 : i32
    return %c0_i32, %c0_i32_0, %c0_i32_1 : i32, i32, i32
  }
  func.func @transform_3(%arg0: i32) -> (i32, i32, i32) {
    %c0_i32 = arith.constant 0 : i32
    %c0_i32_0 = arith.constant 0 : i32
    %c0_i32_1 = arith.constant 0 : i32
    %c0_i32_2 = arith.constant 0 : i32
    return %c0_i32, %c0_i32_0, %c0_i32_1 : i32, i32, i32
  }
  func.func @transform_4(%arg0: i32) -> (i32, i32, i32) {
    %c0_i32 = arith.constant 0 : i32
    %c0_i32_0 = arith.constant 0 : i32
    %c0_i32_1 = arith.constant 0 : i32
    %c0_i32_2 = arith.constant 0 : i32
    return %c0_i32, %c0_i32_0, %c0_i32_1 : i32, i32, i32
  }
  func.func @transform_5(%arg0: i32) -> (i32, i32) {
    %c0_i32 = arith.constant 0 : i32
    %c0_i32_0 = arith.constant 0 : i32
    return %arg0, %c0_i32 : i32, i32
  }
}

</mosaic_0001>

<llo_original>
// kernel: tpu_custom_call.1
$region0: #{tpu_custom_call.1}
  #allocation0 [shape = 'u32[]', space=smem, size = 0x4, offset = 0x4, fixed_abs, tag = 'smem constant byte address 0x4 - core index']
  #allocation1 [shape = 'u32[144,128]{1,0:T(1,128)}', space=vmem, size = 0x12000, scoped, tag = 'internal scratch']
  %s0 = inlined_call_operand.vmem [shape: f32[8,64], index: 0, kind: input, shape index: {}]
  %s1 = inlined_call_operand.vmem [shape: f32[4,64,32], index: 1, kind: input, shape index: {}]
  %s2 = inlined_call_operand.vmem [shape: f32[4,1,32], index: 2, kind: input, shape index: {}]
  %s3 = inlined_call_operand.vmem [shape: f32[4,32,8], index: 3, kind: input, shape index: {}]
  %s4 = inlined_call_operand.vmem [shape: f32[4,1,8], index: 4, kind: input, shape index: {}]
  %s5 = inlined_call_operand.hbm [shape: f32[8,32], index: 5, kind: output, shape index: {}]
  %s6 = sld [smem:[#allocation0]]
  $region30: #{tpu_custom_call.1} parent=0
    _
  %s8 = ssub.s32 1, %s6
  %s9 = scalar_select 0, %s8, %s6
  $region1: #{tpu_custom_call.1} parent=0
    #allocation2 [shape = 'u8[4096]{0}', space=vmem, size = 0x1000, scoped, tag = 'output window, operand 0, single buffered']
    #allocation3 [shape = 's32[1]{0}', space=sflag, size = 0x4, scoped, tag = 'scoped memory for tpu_custom_call.1']
    %10 = vsyncpa [#allocation3], 0
    // Predicated region
    $region2: #{tpu_custom_call.1} parent=1 // pred_check
      _
    $region3: #{tpu_custom_call.1} parent=1 // pred_check_branch
      %12 = sbr.rel (0) target = $region5
    $region4: #{tpu_custom_call.1} parent=1 // pred_region
      _
    $region5: #{tpu_custom_call.1} parent=1 // pred_fallthru
      _
    // Predicated region
    $region6: #{tpu_custom_call.1} parent=1 // pred_check
      _
    $region7: #{tpu_custom_call.1} parent=1 // pred_check_branch
      %14 = sbr.rel (0) target = $region9
    $region8: #{tpu_custom_call.1} parent=1 // pred_region
      _
    $region9: #{tpu_custom_call.1} parent=1 // pred_fallthru
      _
    // Predicated region
    $region10: #{tpu_custom_call.1} parent=1 // pred_check
      _
    $region11: #{tpu_custom_call.1} parent=1 // pred_check_branch
      %16 = sbr.rel (0) target = $region13
    $region12: #{tpu_custom_call.1} parent=1 // pred_region
      _
    $region13: #{tpu_custom_call.1} parent=1 // pred_fallthru
      _
    // Predicated region
    $region14: #{tpu_custom_call.1} parent=1 // pred_check
      _
    $region15: #{tpu_custom_call.1} parent=1 // pred_check_branch
      %18 = sbr.rel (0) target = $region17
    $region16: #{tpu_custom_call.1} parent=1 // pred_region
      _
    $region17: #{tpu_custom_call.1} parent=1 // pred_fallthru
      _
    // Predicated region
    $region18: #{tpu_custom_call.1} parent=1 // pred_check
      _
    $region19: #{tpu_custom_call.1} parent=1 // pred_check_branch
      %20 = sbr.rel (0) target = $region21
    $region20: #{tpu_custom_call.1} parent=1 // pred_region
      _
    $region21: #{tpu_custom_call.1} parent=1 // pred_fallthru
      _
    %v21 = vld [vmem:[%s0] sm:$0xff]
    %v22 = vld [vmem:[%s1] sm:$0xff]
    %v23 = vld [vmem:[%s1 + $0x8] sm:$0xff]
    %v24 = vld [vmem:[%s1 + $0x10] sm:$0xff]
    %v25 = vld [vmem:[%s1 + $0x18] sm:$0xff]
    %v26 = vld [vmem:[%s1 + $0x20] sm:$0xff]
    %v27 = vld [vmem:[%s1 + $0x28] sm:$0xff]
    %v28 = vld [vmem:[%s1 + $0x30] sm:$0xff]
    %v29 = vld [vmem:[%s1 + $0x38] sm:$0xff]
    %v30 = vld [vmem:[%s2] sm:$0x1]
    %v32 = vlaneseq
    %v33 = vshrl.u32 %v32, 7
    %v34 = vsub.s32 0, %v33
    %v35 = vrot.slane %v30, %v34
    %vm37 = vcmask 523264
    %v39 = vsel %vm37, %v21, 0
    %41 = vmatprep.subr.mxu0 0.0
    %42 = vmatpush1.msra.mxu0 0.0
    %43 = vmatprep.subr.mxu0 0.0
    %44 = vmatpush1.msra.mxu0 0.0
    %45 = vmatprep.subr.mxu0 0.0
    %46 = vmatpush1.msra.mxu0 0.0
    %47 = vmatprep.subr.mxu0 0.0
    %48 = vmatpush1.msra.mxu0 0.0
    %49 = vmatprep.subr.mxu0 0.0
    %50 = vmatpush1.msra.mxu0 0.0
    %51 = vmatprep.subr.mxu0 0.0
    %52 = vmatpush1.msra.mxu0 0.0
    %53 = vmatprep.subr.mxu0 0.0
    %54 = vmatpush1.msra.mxu0 0.0
    %55 = vmatprep.subr.mxu0 0.0
    %56 = vmatpush1.msra.mxu0 0.0
    %57 = vmatprep.subr.mxu0 0.0
    %58 = vmatpush1.msra.mxu0 %v29
    %59 = vmatprep.subr.mxu0 0.0
    %60 = vmatpush1.msra.mxu0 %v28
    %61 = vmatprep.subr.mxu0 0.0
    %62 = vmatpush1.msra.mxu0 %v27
    %63 = vmatprep.subr.mxu0 0.0
    %64 = vmatpush1.msra.mxu0 %v26
    %65 = vmatprep.subr.mxu0 0.0
    %66 = vmatpush1.msra.mxu0 %v25
    %67 = vmatprep.subr.mxu0 0.0
    %68 = vmatpush1.msra.mxu0 %v24
    %69 = vmatprep.subr.mxu0 0.0
    %70 = vmatpush1.msra.mxu0 %v23
    %71 = vmatprep.subr.mxu0 0.0
    %72 = vmatpush1.msra.mxu0 %v22
    %73 = vmatprep.subr.mxu0 0.0
    %74 = vmatpush2.msra.mxu0 0.0
    %75 = vmatprep.subr.mxu0 0.0
    %76 = vmatpush2.msra.mxu0 0.0
    %77 = vmatprep.subr.mxu0 0.0
    %78 = vmatpush2.msra.mxu0 0.0
    %79 = vmatprep.subr.mxu0 0.0
    %80 = vmatpush2.msra.mxu0 0.0
    %81 = vmatprep.subr.mxu0 0.0
    %82 = vmatpush2.msra.mxu0 0.0
    %83 = vmatprep.subr.mxu0 0.0
    %84 = vmatpush2.msra.mxu0 0.0
    %85 = vmatprep.subr.mxu0 0.0
    %86 = vmatpush2.msra.mxu0 0.0
    %87 = vmatprep.subr.mxu0 0.0
    %88 = vmatpush2.msra.mxu0 0.0
    %89 = vmatprep.subr.mxu0 0.0
    %90 = vmatpush2.msra.mxu0 0.0
    %91 = vmatprep.subr.mxu0 0.0
    %92 = vmatpush2.msra.mxu0 0.0
    %93 = vmatprep.subr.mxu0 0.0
    %94 = vmatpush2.msra.mxu0 0.0
    %95 = vmatprep.subr.mxu0 0.0
    %96 = vmatpush2.msra.mxu0 0.0
    %97 = vmatprep.subr.mxu0 0.0
    %98 = vmatpush2.msra.mxu0 0.0
    %99 = vmatprep.subr.mxu0 0.0
    %100 = vmatpush2.msra.mxu0 0.0
    %101 = vmatprep.subr.mxu0 0.0
    %102 = vmatpush2.msra.mxu0 0.0
    %103 = vmatprep.subr.mxu0 0.0
    %104 = vmatpush2.msra.mxu0 0.0
    %105 = vmatprep.mubr.f32.mxu0 0.0
    %106 = vmatmul.mubr.f32.gmra.mxu0 %v39
    %v107 = vpop.f32.mrf.mxu0
    %v108 = vadd.f32 %v35, %v107
    %v109 = vpop.f32.mrf.mxu0
    %110 = vdwg.mxu0
    %vm111 = vcmp.ge.f32.partialorder %v108, 0.0
    %v112 = vmul.f32 %v108, 0.01
    %v113 = vsel %vm111, %v108, %v112
    %v114 = vld [vmem:[%s3] sm:$0xff]
    %v115 = vld [vmem:[%s3 + $0x8] sm:$0xff]
    %v116 = vld [vmem:[%s3 + $0x10] sm:$0xff]
    %v117 = vld [vmem:[%s3 + $0x18] sm:$0xff]
    %v118 = vld [vmem:[%s4] sm:$0x1]
    %v120 = vlaneseq
    %v121 = vshrl.u32 %v120, 7
    %v122 = vsub.s32 0, %v121
    %v123 = vrot.slane %v118, %v122
    %vm125 = vcmask 261120
    %v127 = vsel %vm125, %v113, 0
    %129 = vmatprep.subr.mxu0 0.0
    %130 = vmatpush1.msra.mxu0 0.0
    %131 = vmatprep.subr.mxu0 0.0
    %132 = vmatpush1.msra.mxu0 0.0
    %133 = vmatprep.subr.mxu0 0.0
    %134 = vmatpush1.msra.mxu0 0.0
    %135 = vmatprep.subr.mxu0 0.0
    %136 = vmatpush1.msra.mxu0 0.0
    %137 = vmatprep.subr.mxu0 0.0
    %138 = vmatpush1.msra.mxu0 0.0
    %139 = vmatprep.subr.mxu0 0.0
    %140 = vmatpush1.msra.mxu0 0.0
    %141 = vmatprep.subr.mxu0 0.0
    %142 = vmatpush1.msra.mxu0 0.0
    %143 = vmatprep.subr.mxu0 0.0
    %144 = vmatpush1.msra.mxu0 0.0
    %145 = vmatprep.subr.mxu0 0.0
    %146 = vmatpush1.msra.mxu0 0.0
    %147 = vmatprep.subr.mxu0 0.0
    %148 = vmatpush1.msra.mxu0 0.0
    %149 = vmatprep.subr.mxu0 0.0
    %150 = vmatpush1.msra.mxu0 0.0
    %151 = vmatprep.subr.mxu0 0.0
    %152 = vmatpush1.msra.mxu0 0.0
    %153 = vmatprep.subr.mxu0 0.0
    %154 = vmatpush1.msra.mxu0 %v117
    %155 = vmatprep.subr.mxu0 0.0
    %156 = vmatpush1.msra.mxu0 %v116
    %157 = vmatprep.subr.mxu0 0.0
    %158 = vmatpush1.msra.mxu0 %v115
    %159 = vmatprep.subr.mxu0 0.0
    %160 = vmatpush1.msra.mxu0 %v114
    %161 = vmatprep.subr.mxu0 0.0
    %162 = vmatpush2.msra.mxu0 0.0
    %163 = vmatprep.subr.mxu0 0.0
    %164 = vmatpush2.msra.mxu0 0.0
    %165 = vmatprep.subr.mxu0 0.0
    %166 = vmatpush2.msra.mxu0 0.0
    %167 = vmatprep.subr.mxu0 0.0
    %168 = vmatpush2.msra.mxu0 0.0
    %169 = vmatprep.subr.mxu0 0.0
    %170 = vmatpush2.msra.mxu0 0.0
    %171 = vmatprep.subr.mxu0 0.0
    %172 = vmatpush2.msra.mxu0 0.0
    %173 = vmatprep.subr.mxu0 0.0
    %174 = vmatpush2.msra.mxu0 0.0
    %175 = vmatprep.subr.mxu0 0.0
    %176 = vmatpush2.msra.mxu0 0.0
    %177 = vmatprep.subr.mxu0 0.0
    %178 = vmatpush2.msra.mxu0 0.0
    %179 = vmatprep.subr.mxu0 0.0
    %180 = vmatpush2.msra.mxu0 0.0
    %181 = vmatprep.subr.mxu0 0.0
    %182 = vmatpush2.msra.mxu0 0.0
    %183 = vmatprep.subr.mxu0 0.0
    %184 = vmatpush2.msra.mxu0 0.0
    %185 = vmatprep.subr.mxu0 0.0
    %186 = vmatpush2.msra.mxu0 0.0
    %187 = vmatprep.subr.mxu0 0.0
    %188 = vmatpush2.msra.mxu0 0.0
    %189 = vmatprep.subr.mxu0 0.0
    %190 = vmatpush2.msra.mxu0 0.0
    %191 = vmatprep.subr.mxu0 0.0
    %192 = vmatpush2.msra.mxu0 0.0
    %193 = vmatprep.mubr.f32.mxu0 0.0
    %194 = vmatmul.mubr.f32.gmra.mxu0 %v127
    %v195 = vpop.f32.mrf.mxu0
    %v196 = vadd.f32 %v123, %v195
    %v197 = vpop.f32.mrf.mxu0
    %198 = vdwg.mxu0
    %s199 = scalar_lea.vmem %s1, 64
    %v200 = vld [vmem:[%s199] sm:$0xff]
    %v201 = vld [vmem:[%s199 + $0x8] sm:$0xff]
    %v202 = vld [vmem:[%s199 + $0x10] sm:$0xff]
    %v203 = vld [vmem:[%s199 + $0x18] sm:$0xff]
    %v204 = vld [vmem:[%s199 + $0x20] sm:$0xff]
    %v205 = vld [vmem:[%s199 + $0x28] sm:$0xff]
    %v206 = vld [vmem:[%s199 + $0x30] sm:$0xff]
    %v207 = vld [vmem:[%s199 + $0x38] sm:$0xff]
    %s208 = scalar_lea.vmem %s2, 1
    %v209 = vld [vmem:[%s208] sm:$0x1]
    %v211 = vlaneseq
    %v212 = vshrl.u32 %v211, 7
    %v213 = vsub.s32 0, %v212
    %v214 = vrot.slane %v209, %v213
    %216 = vmatprep.subr.mxu0 0.0
    %217 = vmatpush1.msra.mxu0 0.0
    %218 = vmatprep.subr.mxu0 0.0
    %219 = vmatpush1.msra.mxu0 0.0
    %220 = vmatprep.subr.mxu0 0.0
    %221 = vmatpush1.msra.mxu0 0.0
    %222 = vmatprep.subr.mxu0 0.0
    %223 = vmatpush1.msra.mxu0 0.0
    %224 = vmatprep.subr.mxu0 0.0
    %225 = vmatpush1.msra.mxu0 0.0
    %226 = vmatprep.subr.mxu0 0.0
    %227 = vmatpush1.msra.mxu0 0.0
    %228 = vmatprep.subr.mxu0 0.0
    %229 = vmatpush1.msra.mxu0 0.0
    %230 = vmatprep.subr.mxu0 0.0
    %231 = vmatpush1.msra.mxu0 0.0
    %232 = vmatprep.subr.mxu0 0.0
    %233 = vmatpush1.msra.mxu0 %v207
    %234 = vmatprep.subr.mxu0 0.0
    %235 = vmatpush1.msra.mxu0 %v206
    %236 = vmatprep.subr.mxu0 0.0
    %237 = vmatpush1.msra.mxu0 %v205
    %238 = vmatprep.subr.mxu0 0.0
    %239 = vmatpush1.msra.mxu0 %v204
    %240 = vmatprep.subr.mxu0 0.0
    %241 = vmatpush1.msra.mxu0 %v203
    %242 = vmatprep.subr.mxu0 0.0
    %243 = vmatpush1.msra.mxu0 %v202
    %244 = vmatprep.subr.mxu0 0.0
    %245 = vmatpush1.msra.mxu0 %v201
    %246 = vmatprep.subr.mxu0 0.0
    %247 = vmatpush1.msra.mxu0 %v200
    %248 = vmatprep.subr.mxu0 0.0
    %249 = vmatpush2.msra.mxu0 0.0
    %250 = vmatprep.subr.mxu0 0.0
    %251 = vmatpush2.msra.mxu0 0.0
    %252 = vmatprep.subr.mxu0 0.0
    %253 = vmatpush2.msra.mxu0 0.0
    %254 = vmatprep.subr.mxu0 0.0
    %255 = vmatpush2.msra.mxu0 0.0
    %256 = vmatprep.subr.mxu0 0.0
    %257 = vmatpush2.msra.mxu0 0.0
    %258 = vmatprep.subr.mxu0 0.0
    %259 = vmatpush2.msra.mxu0 0.0
    %260 = vmatprep.subr.mxu0 0.0
    %261 = vmatpush2.msra.mxu0 0.0
    %262 = vmatprep.subr.mxu0 0.0
    %263 = vmatpush2.msra.mxu0 0.0
    %264 = vmatprep.subr.mxu0 0.0
    %265 = vmatpush2.msra.mxu0 0.0
    %266 = vmatprep.subr.mxu0 0.0
    %267 = vmatpush2.msra.mxu0 0.0
    %268 = vmatprep.subr.mxu0 0.0
    %269 = vmatpush2.msra.mxu0 0.0
    %270 = vmatprep.subr.mxu0 0.0
    %271 = vmatpush2.msra.mxu0 0.0
    %272 = vmatprep.subr.mxu0 0.0
    %273 = vmatpush2.msra.mxu0 0.0
    %274 = vmatprep.subr.mxu0 0.0
    %275 = vmatpush2.msra.mxu0 0.0
    %276 = vmatprep.subr.mxu0 0.0
    %277 = vmatpush2.msra.mxu0 0.0
    %278 = vmatprep.subr.mxu0 0.0
    %279 = vmatpush2.msra.mxu0 0.0
    %280 = vmatprep.mubr.f32.mxu0 0.0
    %281 = vmatmul.mubr.f32.gmra.mxu0 %v39
    %v282 = vpop.f32.mrf.mxu0
    %v283 = vadd.f32 %v214, %v282
    %v284 = vpop.f32.mrf.mxu0
    %285 = vdwg.mxu0
    %vm286 = vcmp.ge.f32.partialorder %v283, 0.0
    %v287 = vmul.f32 %v283, 0.01
    %v288 = vsel %vm286, %v283, %v287
    %s289 = scalar_lea.vmem %s3, 32
    %v290 = vld [vmem:[%s289] sm:$0xff]
    %v291 = vld [vmem:[%s289 + $0x8] sm:$0xff]
    %v292 = vld [vmem:[%s289 + $0x10] sm:$0xff]
    %v293 = vld [vmem:[%s289 + $0x18] sm:$0xff]
    %s294 = scalar_lea.vmem %s4, 1
    %v295 = vld [vmem:[%s294] sm:$0x1]
    %v297 = vlaneseq
    %v298 = vshrl.u32 %v297, 7
    %v299 = vsub.s32 0, %v298
    %v300 = vrot.slane %v295, %v299
    %v303 = vsel %vm125, %v288, 0
    %305 = vmatprep.subr.mxu0 0.0
    %306 = vmatpush1.msra.mxu0 0.0
    %307 = vmatprep.subr.mxu0 0.0
    %308 = vmatpush1.msra.mxu0 0.0
    %309 = vmatprep.subr.mxu0 0.0
    %310 = vmatpush1.msra.mxu0 0.0
    %311 = vmatprep.subr.mxu0 0.0
    %312 = vmatpush1.msra.mxu0 0.0
    %313 = vmatprep.subr.mxu0 0.0
    %314 = vmatpush1.msra.mxu0 0.0
    %315 = vmatprep.subr.mxu0 0.0
    %316 = vmatpush1.msra.mxu0 0.0
    %317 = vmatprep.subr.mxu0 0.0
    %318 = vmatpush1.msra.mxu0 0.0
    %319 = vmatprep.subr.mxu0 0.0
    %320 = vmatpush1.msra.mxu0 0.0
    %321 = vmatprep.subr.mxu0 0.0
    %322 = vmatpush1.msra.mxu0 0.0
    %323 = vmatprep.subr.mxu0 0.0
    %324 = vmatpush1.msra.mxu0 0.0
    %325 = vmatprep.subr.mxu0 0.0
    %326 = vmatpush1.msra.mxu0 0.0
    %327 = vmatprep.subr.mxu0 0.0
    %328 = vmatpush1.msra.mxu0 0.0
    %329 = vmatprep.subr.mxu0 0.0
    %330 = vmatpush1.msra.mxu0 %v293
    %331 = vmatprep.subr.mxu0 0.0
    %332 = vmatpush1.msra.mxu0 %v292
    %333 = vmatprep.subr.mxu0 0.0
    %334 = vmatpush1.msra.mxu0 %v291
    %335 = vmatprep.subr.mxu0 0.0
    %336 = vmatpush1.msra.mxu0 %v290
    %337 = vmatprep.subr.mxu0 0.0
    %338 = vmatpush2.msra.mxu0 0.0
    %339 = vmatprep.subr.mxu0 0.0
    %340 = vmatpush2.msra.mxu0 0.0
    %341 = vmatprep.subr.mxu0 0.0
    %342 = vmatpush2.msra.mxu0 0.0
    %343 = vmatprep.subr.mxu0 0.0
    %344 = vmatpush2.msra.mxu0 0.0
    %345 = vmatprep.subr.mxu0 0.0
    %346 = vmatpush2.msra.mxu0 0.0
    %347 = vmatprep.subr.mxu0 0.0
    %348 = vmatpush2.msra.mxu0 0.0
    %349 = vmatprep.subr.mxu0 0.0
    %350 = vmatpush2.msra.mxu0 0.0
    %351 = vmatprep.subr.mxu0 0.0
    %352 = vmatpush2.msra.mxu0 0.0
    %353 = vmatprep.subr.mxu0 0.0
    %354 = vmatpush2.msra.mxu0 0.0
    %355 = vmatprep.subr.mxu0 0.0
    %356 = vmatpush2.msra.mxu0 0.0
    %357 = vmatprep.subr.mxu0 0.0
    %358 = vmatpush2.msra.mxu0 0.0
    %359 = vmatprep.subr.mxu0 0.0
    %360 = vmatpush2.msra.mxu0 0.0
    %361 = vmatprep.subr.mxu0 0.0
    %362 = vmatpush2.msra.mxu0 0.0
    %363 = vmatprep.subr.mxu0 0.0
    %364 = vmatpush2.msra.mxu0 0.0
    %365 = vmatprep.subr.mxu0 0.0
    %366 = vmatpush2.msra.mxu0 0.0
    %367 = vmatprep.subr.mxu0 0.0
    %368 = vmatpush2.msra.mxu0 0.0
    %369 = vmatprep.mubr.f32.mxu0 0.0
    %370 = vmatmul.mubr.f32.gmra.mxu0 %v303
    %v371 = vpop.f32.mrf.mxu0
    %v372 = vadd.f32 %v300, %v371
    %v373 = vpop.f32.mrf.mxu0
    %374 = vdwg.mxu0
    %s375 = scalar_lea.vmem %s1, 128
    %v376 = vld [vmem:[%s375] sm:$0xff]
    %v377 = vld [vmem:[%s375 + $0x8] sm:$0xff]
    %v378 = vld [vmem:[%s375 + $0x10] sm:$0xff]
    %v379 = vld [vmem:[%s375 + $0x18] sm:$0xff]
    %v380 = vld [vmem:[%s375 + $0x20] sm:$0xff]
    %v381 = vld [vmem:[%s375 + $0x28] sm:$0xff]
    %v382 = vld [vmem:[%s375 + $0x30] sm:$0xff]
    %v383 = vld [vmem:[%s375 + $0x38] sm:$0xff]
    %s384 = scalar_lea.vmem %s2, 2
    %v385 = vld [vmem:[%s384] sm:$0x1]
    %v387 = vlaneseq
    %v388 = vshrl.u32 %v387, 7
    %v389 = vsub.s32 0, %v388
    %v390 = vrot.slane %v385, %v389
    %392 = vmatprep.subr.mxu0 0.0
    %393 = vmatpush1.msra.mxu0 0.0
    %394 = vmatprep.subr.mxu0 0.0
    %395 = vmatpush1.msra.mxu0 0.0
    %396 = vmatprep.subr.mxu0 0.0
    %397 = vmatpush1.msra.mxu0 0.0
    %398 = vmatprep.subr.mxu0 0.0
    %399 = vmatpush1.msra.mxu0 0.0
    %400 = vmatprep.subr.mxu0 0.0
    %401 = vmatpush1.msra.mxu0 0.0
    %402 = vmatprep.subr.mxu0 0.0
    %403 = vmatpush1.msra.mxu0 0.0
    %404 = vmatprep.subr.mxu0 0.0
    %405 = vmatpush1.msra.mxu0 0.0
    %406 = vmatprep.subr.mxu0 0.0
    %407 = vmatpush1.msra.mxu0 0.0
    %408 = vmatprep.subr.mxu0 0.0
    %409 = vmatpush1.msra.mxu0 %v383
    %410 = vmatprep.subr.mxu0 0.0
    %411 = vmatpush1.msra.mxu0 %v382
    %412 = vmatprep.subr.mxu0 0.0
    %413 = vmatpush1.msra.mxu0 %v381
    %414 = vmatprep.subr.mxu0 0.0
    %415 = vmatpush1.msra.mxu0 %v380
    %416 = vmatprep.subr.mxu0 0.0
    %417 = vmatpush1.msra.mxu0 %v379
    %418 = vmatprep.subr.mxu0 0.0
    %419 = vmatpush1.msra.mxu0 %v378
    %420 = vmatprep.subr.mxu0 0.0
    %421 = vmatpush1.msra.mxu0 %v377
    %422 = vmatprep.subr.mxu0 0.0
    %423 = vmatpush1.msra.mxu0 %v376
    %424 = vmatprep.subr.mxu0 0.0
    %425 = vmatpush2.msra.mxu0 0.0
    %426 = vmatprep.subr.mxu0 0.0
    %427 = vmatpush2.msra.mxu0 0.0
    %428 = vmatprep.subr.mxu0 0.0
    %429 = vmatpush2.msra.mxu0 0.0
    %430 = vmatprep.subr.mxu0 0.0
    %431 = vmatpush2.msra.mxu0 0.0
    %432 = vmatprep.subr.mxu0 0.0
    %433 = vmatpush2.msra.mxu0 0.0
    %434 = vmatprep.subr.mxu0 0.0
    %435 = vmatpush2.msra.mxu0 0.0
    %436 = vmatprep.subr.mxu0 0.0
    %437 = vmatpush2.msra.mxu0 0.0
    %438 = vmatprep.subr.mxu0 0.0
    %439 = vmatpush2.msra.mxu0 0.0
    %440 = vmatprep.subr.mxu0 0.0
    %441 = vmatpush2.msra.mxu0 0.0
    %442 = vmatprep.subr.mxu0 0.0
    %443 = vmatpush2.msra.mxu0 0.0
    %444 = vmatprep.subr.mxu0 0.0
    %445 = vmatpush2.msra.mxu0 0.0
    %446 = vmatprep.subr.mxu0 0.0
    %447 = vmatpush2.msra.mxu0 0.0
    %448 = vmatprep.subr.mxu0 0.0
    %449 = vmatpush2.msra.mxu0 0.0
    %450 = vmatprep.subr.mxu0 0.0
    %451 = vmatpush2.msra.mxu0 0.0
    %452 = vmatprep.subr.mxu0 0.0
    %453 = vmatpush2.msra.mxu0 0.0
    %454 = vmatprep.subr.mxu0 0.0
    %455 = vmatpush2.msra.mxu0 0.0
    %456 = vmatprep.mubr.f32.mxu0 0.0
    %457 = vmatmul.mubr.f32.gmra.mxu0 %v39
    %v458 = vpop.f32.mrf.mxu0
    %v459 = vadd.f32 %v390, %v458
    %v460 = vpop.f32.mrf.mxu0
    %461 = vdwg.mxu0
    %vm462 = vcmp.ge.f32.partialorder %v459, 0.0
    %v463 = vmul.f32 %v459, 0.01
    %v464 = vsel %vm462, %v459, %v463
    %s465 = scalar_lea.vmem %s3, 64
    %v466 = vld [vmem:[%s465] sm:$0xff]
    %v467 = vld [vmem:[%s465 + $0x8] sm:$0xff]
    %v468 = vld [vmem:[%s465 + $0x10] sm:$0xff]
    %v469 = vld [vmem:[%s465 + $0x18] sm:$0xff]
    %s470 = scalar_lea.vmem %s4, 2
    %v471 = vld [vmem:[%s470] sm:$0x1]
    %v473 = vlaneseq
    %v474 = vshrl.u32 %v473, 7
    %v475 = vsub.s32 0, %v474
    %v476 = vrot.slane %v471, %v475
    %v479 = vsel %vm125, %v464, 0
    %481 = vmatprep.subr.mxu0 0.0
    %482 = vmatpush1.msra.mxu0 0.0
    %483 = vmatprep.subr.mxu0 0.0
    %484 = vmatpush1.msra.mxu0 0.0
    %485 = vmatprep.subr.mxu0 0.0
    %486 = vmatpush1.msra.mxu0 0.0
    %487 = vmatprep.subr.mxu0 0.0
    %488 = vmatpush1.msra.mxu0 0.0
    %489 = vmatprep.subr.mxu0 0.0
    %490 = vmatpush1.msra.mxu0 0.0
    %491 = vmatprep.subr.mxu0 0.0
    %492 = vmatpush1.msra.mxu0 0.0
    %493 = vmatprep.subr.mxu0 0.0
    %494 = vmatpush1.msra.mxu0 0.0
    %495 = vmatprep.subr.mxu0 0.0
    %496 = vmatpush1.msra.mxu0 0.0
    %497 = vmatprep.subr.mxu0 0.0
    %498 = vmatpush1.msra.mxu0 0.0
    %499 = vmatprep.subr.mxu0 0.0
    %500 = vmatpush1.msra.mxu0 0.0
    %501 = vmatprep.subr.mxu0 0.0
    %502 = vmatpush1.msra.mxu0 0.0
    %503 = vmatprep.subr.mxu0 0.0
    %504 = vmatpush1.msra.mxu0 0.0
    %505 = vmatprep.subr.mxu0 0.0
    %506 = vmatpush1.msra.mxu0 %v469
    %507 = vmatprep.subr.mxu0 0.0
    %508 = vmatpush1.msra.mxu0 %v468
    %509 = vmatprep.subr.mxu0 0.0
    %510 = vmatpush1.msra.mxu0 %v467
    %511 = vmatprep.subr.mxu0 0.0
    %512 = vmatpush1.msra.mxu0 %v466
    %513 = vmatprep.subr.mxu0 0.0
    %514 = vmatpush2.msra.mxu0 0.0
    %515 = vmatprep.subr.mxu0 0.0
    %516 = vmatpush2.msra.mxu0 0.0
    %517 = vmatprep.subr.mxu0 0.0
    %518 = vmatpush2.msra.mxu0 0.0
    %519 = vmatprep.subr.mxu0 0.0
    %520 = vmatpush2.msra.mxu0 0.0
    %521 = vmatprep.subr.mxu0 0.0
    %522 = vmatpush2.msra.mxu0 0.0
    %523 = vmatprep.subr.mxu0 0.0
    %524 = vmatpush2.msra.mxu0 0.0
    %525 = vmatprep.subr.mxu0 0.0
    %526 = vmatpush2.msra.mxu0 0.0
    %527 = vmatprep.subr.mxu0 0.0
    %528 = vmatpush2.msra.mxu0 0.0
    %529 = vmatprep.subr.mxu0 0.0
    %530 = vmatpush2.msra.mxu0 0.0
    %531 = vmatprep.subr.mxu0 0.0
    %532 = vmatpush2.msra.mxu0 0.0
    %533 = vmatprep.subr.mxu0 0.0
    %534 = vmatpush2.msra.mxu0 0.0
    %535 = vmatprep.subr.mxu0 0.0
    %536 = vmatpush2.msra.mxu0 0.0
    %537 = vmatprep.subr.mxu0 0.0
    %538 = vmatpush2.msra.mxu0 0.0
    %539 = vmatprep.subr.mxu0 0.0
    %540 = vmatpush2.msra.mxu0 0.0
    %541 = vmatprep.subr.mxu0 0.0
    %542 = vmatpush2.msra.mxu0 0.0
    %543 = vmatprep.subr.mxu0 0.0
    %544 = vmatpush2.msra.mxu0 0.0
    %545 = vmatprep.mubr.f32.mxu0 0.0
    %546 = vmatmul.mubr.f32.gmra.mxu0 %v479
    %v547 = vpop.f32.mrf.mxu0
    %v548 = vadd.f32 %v476, %v547
    %v549 = vpop.f32.mrf.mxu0
    %550 = vdwg.mxu0
    %s551 = scalar_lea.vmem %s1, 192
    %v552 = vld [vmem:[%s551] sm:$0xff]
    %v553 = vld [vmem:[%s551 + $0x8] sm:$0xff]
    %v554 = vld [vmem:[%s551 + $0x10] sm:$0xff]
    %v555 = vld [vmem:[%s551 + $0x18] sm:$0xff]
    %v556 = vld [vmem:[%s551 + $0x20] sm:$0xff]
    %v557 = vld [vmem:[%s551 + $0x28] sm:$0xff]
    %v558 = vld [vmem:[%s551 + $0x30] sm:$0xff]
    %v559 = vld [vmem:[%s551 + $0x38] sm:$0xff]
    %s560 = scalar_lea.vmem %s2, 3
    %v561 = vld [vmem:[%s560] sm:$0x1]
    %v563 = vlaneseq
    %v564 = vshrl.u32 %v563, 7
    %v565 = vsub.s32 0, %v564
    %v566 = vrot.slane %v561, %v565
    %568 = vmatprep.subr.mxu0 0.0
    %569 = vmatpush1.msra.mxu0 0.0
    %570 = vmatprep.subr.mxu0 0.0
    %571 = vmatpush1.msra.mxu0 0.0
    %572 = vmatprep.subr.mxu0 0.0
    %573 = vmatpush1.msra.mxu0 0.0
    %574 = vmatprep.subr.mxu0 0.0
    %575 = vmatpush1.msra.mxu0 0.0
    %576 = vmatprep.subr.mxu0 0.0
    %577 = vmatpush1.msra.mxu0 0.0
    %578 = vmatprep.subr.mxu0 0.0
    %579 = vmatpush1.msra.mxu0 0.0
    %580 = vmatprep.subr.mxu0 0.0
    %581 = vmatpush1.msra.mxu0 0.0
    %582 = vmatprep.subr.mxu0 0.0
    %583 = vmatpush1.msra.mxu0 0.0
    %584 = vmatprep.subr.mxu0 0.0
    %585 = vmatpush1.msra.mxu0 %v559
    %586 = vmatprep.subr.mxu0 0.0
    %587 = vmatpush1.msra.mxu0 %v558
    %588 = vmatprep.subr.mxu0 0.0
    %589 = vmatpush1.msra.mxu0 %v557
    %590 = vmatprep.subr.mxu0 0.0
    %591 = vmatpush1.msra.mxu0 %v556
    %592 = vmatprep.subr.mxu0 0.0
    %593 = vmatpush1.msra.mxu0 %v555
    %594 = vmatprep.subr.mxu0 0.0
    %595 = vmatpush1.msra.mxu0 %v554
    %596 = vmatprep.subr.mxu0 0.0
    %597 = vmatpush1.msra.mxu0 %v553
    %598 = vmatprep.subr.mxu0 0.0
    %599 = vmatpush1.msra.mxu0 %v552
    %600 = vmatprep.subr.mxu0 0.0
    %601 = vmatpush2.msra.mxu0 0.0
    %602 = vmatprep.subr.mxu0 0.0
    %603 = vmatpush2.msra.mxu0 0.0
    %604 = vmatprep.subr.mxu0 0.0
    %605 = vmatpush2.msra.mxu0 0.0
    %606 = vmatprep.subr.mxu0 0.0
    %607 = vmatpush2.msra.mxu0 0.0
    %608 = vmatprep.subr.mxu0 0.0
    %609 = vmatpush2.msra.mxu0 0.0
    %610 = vmatprep.subr.mxu0 0.0
    %611 = vmatpush2.msra.mxu0 0.0
    %612 = vmatprep.subr.mxu0 0.0
    %613 = vmatpush2.msra.mxu0 0.0
    %614 = vmatprep.subr.mxu0 0.0
    %615 = vmatpush2.msra.mxu0 0.0
    %616 = vmatprep.subr.mxu0 0.0
    %617 = vmatpush2.msra.mxu0 0.0
    %618 = vmatprep.subr.mxu0 0.0
    %619 = vmatpush2.msra.mxu0 0.0
    %620 = vmatprep.subr.mxu0 0.0
    %621 = vmatpush2.msra.mxu0 0.0
    %622 = vmatprep.subr.mxu0 0.0
    %623 = vmatpush2.msra.mxu0 0.0
    %624 = vmatprep.subr.mxu0 0.0
    %625 = vmatpush2.msra.mxu0 0.0
    %626 = vmatprep.subr.mxu0 0.0
    %627 = vmatpush2.msra.mxu0 0.0
    %628 = vmatprep.subr.mxu0 0.0
    %629 = vmatpush2.msra.mxu0 0.0
    %630 = vmatprep.subr.mxu0 0.0
    %631 = vmatpush2.msra.mxu0 0.0
    %632 = vmatprep.mubr.f32.mxu0 0.0
    %633 = vmatmul.mubr.f32.gmra.mxu0 %v39
    %v634 = vpop.f32.mrf.mxu0
    %v635 = vadd.f32 %v566, %v634
    %v636 = vpop.f32.mrf.mxu0
    %637 = vdwg.mxu0
    %vm638 = vcmp.ge.f32.partialorder %v635, 0.0
    %v639 = vmul.f32 %v635, 0.01
    %v640 = vsel %vm638, %v635, %v639
    %s641 = scalar_lea.vmem %s3, 96
    %v642 = vld [vmem:[%s641] sm:$0xff]
    %v643 = vld [vmem:[%s641 + $0x8] sm:$0xff]
    %v644 = vld [vmem:[%s641 + $0x10] sm:$0xff]
    %v645 = vld [vmem:[%s641 + $0x18] sm:$0xff]
    %s646 = scalar_lea.vmem %s4, 3
    %v647 = vld [vmem:[%s646] sm:$0x1]
    %v649 = vlaneseq
    %v650 = vshrl.u32 %v649, 7
    %v651 = vsub.s32 0, %v650
    %v652 = vrot.slane %v647, %v651
    %v655 = vsel %vm125, %v640, 0
    %657 = vmatprep.subr.mxu0 0.0
    %658 = vmatpush1.msra.mxu0 0.0
    %659 = vmatprep.subr.mxu0 0.0
    %660 = vmatpush1.msra.mxu0 0.0
    %661 = vmatprep.subr.mxu0 0.0
    %662 = vmatpush1.msra.mxu0 0.0
    %663 = vmatprep.subr.mxu0 0.0
    %664 = vmatpush1.msra.mxu0 0.0
    %665 = vmatprep.subr.mxu0 0.0
    %666 = vmatpush1.msra.mxu0 0.0
    %667 = vmatprep.subr.mxu0 0.0
    %668 = vmatpush1.msra.mxu0 0.0
    %669 = vmatprep.subr.mxu0 0.0
    %670 = vmatpush1.msra.mxu0 0.0
    %671 = vmatprep.subr.mxu0 0.0
    %672 = vmatpush1.msra.mxu0 0.0
    %673 = vmatprep.subr.mxu0 0.0
    %674 = vmatpush1.msra.mxu0 0.0
    %675 = vmatprep.subr.mxu0 0.0
    %676 = vmatpush1.msra.mxu0 0.0
    %677 = vmatprep.subr.mxu0 0.0
    %678 = vmatpush1.msra.mxu0 0.0
    %679 = vmatprep.subr.mxu0 0.0
    %680 = vmatpush1.msra.mxu0 0.0
    %681 = vmatprep.subr.mxu0 0.0
    %682 = vmatpush1.msra.mxu0 %v645
    %683 = vmatprep.subr.mxu0 0.0
    %684 = vmatpush1.msra.mxu0 %v644
    %685 = vmatprep.subr.mxu0 0.0
    %686 = vmatpush1.msra.mxu0 %v643
    %687 = vmatprep.subr.mxu0 0.0
    %688 = vmatpush1.msra.mxu0 %v642
    %689 = vmatprep.subr.mxu0 0.0
    %690 = vmatpush2.msra.mxu0 0.0
    %691 = vmatprep.subr.mxu0 0.0
    %692 = vmatpush2.msra.mxu0 0.0
    %693 = vmatprep.subr.mxu0 0.0
    %694 = vmatpush2.msra.mxu0 0.0
    %695 = vmatprep.subr.mxu0 0.0
    %696 = vmatpush2.msra.mxu0 0.0
    %697 = vmatprep.subr.mxu0 0.0
    %698 = vmatpush2.msra.mxu0 0.0
    %699 = vmatprep.subr.mxu0 0.0
    %700 = vmatpush2.msra.mxu0 0.0
    %701 = vmatprep.subr.mxu0 0.0
    %702 = vmatpush2.msra.mxu0 0.0
    %703 = vmatprep.subr.mxu0 0.0
    %704 = vmatpush2.msra.mxu0 0.0
    %705 = vmatprep.subr.mxu0 0.0
    %706 = vmatpush2.msra.mxu0 0.0
    %707 = vmatprep.subr.mxu0 0.0
    %708 = vmatpush2.msra.mxu0 0.0
    %709 = vmatprep.subr.mxu0 0.0
    %710 = vmatpush2.msra.mxu0 0.0
    %711 = vmatprep.subr.mxu0 0.0
    %712 = vmatpush2.msra.mxu0 0.0
    %713 = vmatprep.subr.mxu0 0.0
    %714 = vmatpush2.msra.mxu0 0.0
    %715 = vmatprep.subr.mxu0 0.0
    %716 = vmatpush2.msra.mxu0 0.0
    %717 = vmatprep.subr.mxu0 0.0
    %718 = vmatpush2.msra.mxu0 0.0
    %719 = vmatprep.subr.mxu0 0.0
    %720 = vmatpush2.msra.mxu0 0.0
    %721 = vmatprep.mubr.f32.mxu0 0.0
    %722 = vmatmul.mubr.f32.gmra.mxu0 %v655
    %v723 = vpop.f32.mrf.mxu0
    %v724 = vadd.f32 %v652, %v723
    %v725 = vpop.f32.mrf.mxu0
    %726 = vdwg.mxu0
    %728 = vrot.lane.b32.xlu0 %v372, 8
    %v729 = vpop.permute.xlu0 %728
    %732 = vrot.lane.b32.xlu0 %v548, 16
    %v733 = vpop.permute.xlu0 %732
    %736 = vrot.lane.b32.xlu0 %v724, 24
    %v737 = vpop.permute.xlu0 %736
    %vm739 = vcmask 64512
    %v740 = vsel %vm739, %v196, %v729
    %vm741 = vcmask 130048
    %v742 = vsel %vm741, %v740, %v733
    %vm743 = vcmask 195584
    %v744 = vsel %vm743, %v742, %v737
    %745 = vst.msk [vmem:[#allocation2] sm:$0xff] %vm125, %v744
    // Predicated region
    $region22: #{tpu_custom_call.1} parent=1 // pred_check
      _
    $region23: #{tpu_custom_call.1} parent=1 // pred_check_branch
      %747 = sbr.rel (0) target = $region25
    $region24: #{tpu_custom_call.1} parent=1 // pred_region
      %s749 = ssub.s32 128, 128
      %750 = vsyncadd [#allocation3], %s749
      %s752 = sshll.u32 [#allocation2], 4
      %s753 = int_to_ptr.vmem [resolvable:$true] %s752
      %755 = dma.vmem_to_hbm [thread:$0]  %s753, 128, %s5, [#allocation3]
    $region25: #{tpu_custom_call.1} parent=1 // pred_fallthru
      _
    // Predicated region
    $region26: #{tpu_custom_call.1} parent=1 // pred_check
      _
    $region27: #{tpu_custom_call.1} parent=1 // pred_check_branch
      %757 = sbr.rel (0) target = $region29
    $region28: #{tpu_custom_call.1} parent=1 // pred_region
      %758 = dma.done [#allocation3], 128
    $region29: #{tpu_custom_call.1} parent=1 // pred_fallthru
      _
    %759 = vsyncpa [#allocation3], 1

</llo_original>
